<compile_context>
chip_gen: v7x
topology: tpu7x:2x2x1
jax: 0.10.0
libtpu: 0.0.40
codegen_flags: <defaults>
</compile_context>

<pallas_src>
import jax
import jax.numpy as jnp
from jax import lax
from jax.experimental import pallas as pl
from jax.experimental.pallas import tpu as pltpu


def _round_up(x: int, m: int) -> int:
    return (x + m - 1) // m * m


# ----------------------------------------------------------------------------
# Kernel 1: fused sigmoid + (prob_per_token @ token_mask.T) + per-query
# max/argmax over one query tile of one image.
# ----------------------------------------------------------------------------
def _score_kernel(logit_ref, maskT_ref, prob_ref, qmax_ref, qarg_ref):
    # logit_ref: (1, TQ, T) bf16   -- one query tile of one image
    # maskT_ref: (T, C_pad) bf16   -- resident (index_map constant across grid)
    # prob_ref : (1, TQ, C_pad) f32, lane-dense (C_pad % 128 == 0)
    # qmax_ref : (1, TQ, 1) f32    -- per-query max score
    # qarg_ref : (1, TQ, 1) i32    -- per-query argmax class id
    p = jax.nn.sigmoid(logit_ref[0].astype(jnp.float32))            # (TQ, T) f32
    scores = lax.dot_general(
        p.astype(jnp.bfloat16), maskT_ref[...],                      # bf16 MXU operands
        (((1,), (0,)), ((), ())),                                    # (TQ,T)x(T,C_pad)
        preferred_element_type=jnp.float32)                          # f32 accumulation
    prob_ref[0] = scores

    # epilogue: max / first-occurrence argmax over the class axis (XLU slot).
    m = jnp.max(scores, axis=-1, keepdims=True)                      # (TQ, 1)
    qmax_ref[0] = m
    col = lax.broadcasted_iota(jnp.int32, scores.shape, 1)           # (TQ, C_pad)
    qarg_ref[0] = jnp.min(jnp.where(scores >= m, col, scores.shape[-1]),
                          axis=-1, keepdims=True).astype(jnp.int32)


def fused_class_scores(pred_logit, token_mask, *, max_tq=2048):
    """Returns (prob [B,Q,C_pad] f32, max_score [B,Q] f32, max_clsid [B,Q] i32)."""
    B, Q, T = pred_logit.shape
    C, T2 = token_mask.shape
    assert T == T2

    C_pad = _round_up(C, 128)               # lane-dense output stores

    # Query tile: single-TC chips want one big tile per image (fewer grid
    # steps); if B == 1, keep >= 2 tiles so dual-TC v7x still splits the grid.
    n_q_min = 2 if B == 1 else 1
    tq_target = pl.cdiv(Q, n_q_min)
    if Q <= 8:
        TQ = Q                               # block == full dim (always legal)
    else:
        TQ = min(max_tq, max(8, (min(tq_target, Q) // 8) * 8))
    n_q = pl.cdiv(Q, TQ)                     # ragged last block handled by Pallas

    # Halve the dominant HBM stream; the kernel upcasts to f32 for sigmoid.
    logits = pred_logit.astype(jnp.bfloat16)

    mask = token_mask.astype(jnp.bfloat16)   # pre-cast once, outside the kernel
    if C_pad != C:
        # zero rows -> padded class probs are exactly 0, never selected downstream
        mask = jnp.pad(mask, ((0, C_pad - C), (0, 0)))
    maskT = mask.T                           # (T, C_pad): natural (K, N) MXU RHS

    probs, qmax, qarg = pl.pallas_call(
        _score_kernel,
        out_shape=(jax.ShapeDtypeStruct((B, Q, C_pad), jnp.float32),
                   jax.ShapeDtypeStruct((B, Q, 1), jnp.float32),
                   jax.ShapeDtypeStruct((B, Q, 1), jnp.int32)),
        grid_spec=pltpu.PrefetchScalarGridSpec(
            num_scalar_prefetch=0,
            grid=(B, n_q),
            in_specs=[
                pl.BlockSpec((1, TQ, T), lambda b, q: (b, q, 0)),
                pl.BlockSpec((T, C_pad), lambda b, q: (0, 0)),
            ],
            out_specs=(
                pl.BlockSpec((1, TQ, C_pad), lambda b, q: (b, q, 0)),
                pl.BlockSpec((1, TQ, 1), lambda b, q: (b, q, 0)),
                pl.BlockSpec((1, TQ, 1), lambda b, q: (b, q, 0)),
            ),
        ),
        compiler_params=pltpu.CompilerParams(
            dimension_semantics=("parallel", "parallel")),
    )(logits, maskT)

    return probs, qmax[..., 0], qarg[..., 0]


# ----------------------------------------------------------------------------
# Kernel 2: CXCYWH -> XYXY conversion fused with per-image (w, h) scaling for
# both box sets (top-k boxes and unprocessed boxes) in ONE launch.
# Layout: (B, 8, Q) -- 2 sets x 4 coords fill a full 8-sublane group, queries
# are lane-dense; per-image scale is a tiny (B, 8, 1) VMEM input.
# ----------------------------------------------------------------------------
def _box_kernel(boxes_ref, scale_ref, out_ref):
    # boxes_ref: (B, 8, Q) f32, rows [cx_t, cx_u, cy_t, cy_u, w_t, w_u, h_t, h_u]
    # scale_ref: (B, 8, 1) f32, rows [w, w, h, h, w, w, h, h]
    # out_ref  : (B, 8, Q) f32, rows [x1_t, x1_u, y1_t, y1_u, x2_t, x2_u, y2_t, y2_u]
    x = boxes_ref[...]
    s = scale_ref[...]
    c = x[:, 0:4, :]                                   # centers (cx, cy) per set
    wh = x[:, 4:8, :]                                  # sizes   (w, h)  per set
    out_ref[:, 0:4, :] = (c - 0.5 * wh) * s[:, 0:4, :]
    out_ref[:, 4:8, :] = (c + 0.5 * wh) * s[:, 4:8, :]


def convert_and_scale_boxes(topk_boxes, unproc_boxes, image_wh):
    # topk_boxes, unproc_boxes: (B, Q, 4) normalized cxcywh; image_wh: (B, 2)=(w,h)
    B, Q, _ = topk_boxes.shape
    # rows (coord-major, set-minor): [cx_t, cx_u, cy_t, cy_u, w_t, w_u, h_t, h_u]
    slab = jnp.stack([topk_boxes, unproc_boxes], axis=-1)            # (B, Q, 4, 2)
    slab = slab.transpose(0, 2, 3, 1).reshape(B, 8, Q)               # (B, 8, Q)

    w = image_wh[:, 0].astype(jnp.float32)
    h = image_wh[:, 1].astype(jnp.float32)
    s4 = jnp.stack([w, w, h, h], axis=-1)                            # (B, 4)
    scale = jnp.concatenate([s4, s4], axis=-1).reshape(B, 8, 1)      # (B, 8, 1)

    out = pl.pallas_call(
        _box_kernel,
        out_shape=jax.ShapeDtypeStruct((B, 8, Q), jnp.float32),
    )(slab.astype(jnp.float32), scale)

    # rows of out: [x1_t, x1_u, y1_t, y1_u, x2_t, x2_u, y2_t, y2_u]
    return out.reshape(B, 4, 2, Q).transpose(2, 0, 3, 1)             # (2, B, Q, 4)


# ----------------------------------------------------------------------------
# Forward pass (chunk concat / top-k / gather are glue; heavy math in kernels)
# ----------------------------------------------------------------------------
def grounding_dino_forward(pred_logit_chunks, pred_box_chunks, token_mask_chunks,
                           image_sizes):
    # mirrors: torch.cat(chunks, dim=-2)
    pred_logit = jnp.concatenate(pred_logit_chunks, axis=-2)   # [B, Q, T]
    pred_boxes = jnp.concatenate(pred_box_chunks, axis=-2)     # [B, Q, 4]
    token_mask = jnp.concatenate(token_mask_chunks, axis=-2)   # [C, T]
    C = token_mask.shape[0]

    prob_full, max_score, max_clsid = fused_class_scores(pred_logit, token_mask)
    B, Q, C_pad = prob_full.shape

    # top_k over the contiguous C_pad domain: padded class columns are exactly
    # 0 and real scores are strictly > 0, so padded entries are never selected;
    # decoding therefore uses C_pad. This avoids a non-contiguous :C slice
    # (a full HBM copy at production sizes) feeding the reshape.
    # TODO(synk): fuse a per-Q-tile partial top-k into the score kernel; the
    # XLA sort-based top_k dominates this head at production Q*C.
    topk_score, topk_ind = lax.top_k(prob_full.reshape(B, Q * C_pad), Q)
    topk_cname = jnp.minimum(topk_ind % C_pad, C - 1).astype(jnp.int32)  # clamp: safety only
    topk_bxind = topk_ind // C_pad
    topk_boxes = jnp.take_along_axis(
        pred_boxes, jnp.broadcast_to(topk_bxind[:, :, None], (B, Q, 4)), axis=1)

    # postprocess: BoxMode.convert(CXCYWH_ABS -> XYXY_ABS) + Boxes.scale(w, h)
    image_wh = jnp.stack([image_sizes[:, 1], image_sizes[:, 0]], axis=-1)  # (B, 2)
    boxes_xyxy = convert_and_scale_boxes(topk_boxes, pred_boxes, image_wh)

    return {
        "pred_boxes": boxes_xyxy[0],                # [B, Q, 4] xyxy abs
        "pred_score": topk_score,                   # [B, Q]
        "pred_cname": topk_cname,                   # [B, Q]
        "unprocessed_boxes": boxes_xyxy[1],         # [B, Q, 4]
        "unprocessed_bxind": topk_bxind,            # [B, Q]
        "unprocessed_clsid": max_clsid,             # [B, Q]  (fused kernel argmax)
        "unprocessed_score": max_score,             # [B, Q]  (fused kernel max)
        "prob_per_cname": prob_full[:, :, :C],      # sliced only for callers/tests
    }


if __name__ == "__main__":
    key = jax.random.PRNGKey(0)

    B = 2              # batch
    Q_CHUNK = 32       # queries per chunk (real model: 900)
    N_CHUNKS = 2       # class-name chunks
    T = 32             # text-token context (real model: 256)
    C_CHUNK = 4        # classes per chunk

    k1, k2, k3 = jax.random.split(key, 3)

    pred_logit_chunks, pred_box_chunks, token_mask_chunks = [], [], []
    for ci in range(N_CHUNKS):
        kl, kb, km, k1 = jax.random.split(jax.random.fold_in(k1, ci), 4)
        pred_logit_chunks.append(
            jax.random.normal(kl, (B, Q_CHUNK, T), dtype=jnp.float32))
        pred_box_chunks.append(
            jax.random.uniform(kb, (B, Q_CHUNK, 4), dtype=jnp.float32,
                               minval=0.05, maxval=0.5))
        # positive-map style token mask: a few positive tokens per class, row-normalized
        raw = (jax.random.uniform(km, (C_CHUNK, T)) < 0.15).astype(jnp.float32)
        raw = raw.at[:, ci * C_CHUNK:(ci + 1) * C_CHUNK].set(
            raw[:, ci * C_CHUNK:(ci + 1) * C_CHUNK] + jnp.eye(C_CHUNK))
        token_mask_chunks.append(raw / jnp.sum(raw, axis=-1, keepdims=True))

    image_sizes = jnp.array([[480, 640], [600, 800]], dtype=jnp.int32)  # (h, w)

    out = grounding_dino_forward(pred_logit_chunks, pred_box_chunks,
                                 token_mask_chunks, image_sizes)
    out = jax.tree_util.tree_map(jax.block_until_ready, out)

    # ---- pure-JAX reference check of the kernel hot paths ----
    pred_logit = jnp.concatenate(pred_logit_chunks, axis=-2)
    pred_boxes = jnp.concatenate(pred_box_chunks, axis=-2)
    token_mask = jnp.concatenate(token_mask_chunks, axis=-2)

    # f32 reference; kernel streams bf16 logits and uses bf16 MXU operands
    # (f32 accumulation), so tolerance is bf16 quantization level.
    ref_prob = jax.nn.sigmoid(pred_logit) @ token_mask.T
    assert jnp.allclose(out["prob_per_cname"], ref_prob, atol=3e-2, rtol=3e-2)
    assert jnp.allclose(out["unprocessed_score"], ref_prob.max(axis=-1), atol=3e-2)
    # fused argmax is consistent with the kernel's own score output
    assert jnp.array_equal(
        out["unprocessed_clsid"].astype(jnp.int32),
        jnp.argmax(out["prob_per_cname"], axis=-1).astype(jnp.int32))
    chosen = jnp.take_along_axis(ref_prob, out["unprocessed_clsid"][..., None],
                                 axis=-1)[..., 0]
    assert jnp.all(chosen >= ref_prob.max(axis=-1) - 3e-2)

    # top-k scores (sorted values) match the f32 reference within bf16 tolerance
    Bc, Qc, Cc = ref_prob.shape
    ref_topk, _ = lax.top_k(ref_prob.reshape(Bc, Qc * Cc), Qc)
    assert jnp.allclose(out["pred_score"], ref_topk, atol=3e-2)
    assert jnp.all(out["pred_cname"] >= 0) and jnp.all(out["pred_cname"] < Cc)

    hw = image_sizes.astype(jnp.float32)
    ref_scale = jnp.stack([hw[:, 1], hw[:, 0], hw[:, 1], hw[:, 0]], -1)[:, None, :]
    cx, cy, w, h = [pred_boxes[..., i] for i in range(4)]
    ref_xyxy = jnp.stack([cx - 0.5 * w, cy - 0.5 * h, cx + 0.5 * w, cy + 0.5 * h], -1)
    assert jnp.allclose(out["unprocessed_boxes"], ref_xyxy * ref_scale, atol=1e-4)

    # top-k boxes: same conversion applied to the gathered set
    gathered = jnp.take_along_axis(
        pred_boxes,
        jnp.broadcast_to(out["unprocessed_bxind"][:, :, None],
                         pred_boxes.shape[:2] + (4,)), axis=1)
    gcx, gcy, gw, gh = [gathered[..., i] for i in range(4)]
    gref = jnp.stack([gcx - 0.5 * gw, gcy - 0.5 * gh,
                      gcx + 0.5 * gw, gcy + 0.5 * gh], -1) * ref_scale
    assert jnp.allclose(out["pred_boxes"], gref, atol=1e-4)

    print("KERNEL_OK")
</pallas_src>

<mosaic_0001>
module attributes {stable_mosaic.version = 11 : i64} {
  func.func @_score_kernel(%arg0: i32, %arg1: i32, %arg2: memref<1x64x32xbf16, #tpu.memory_space<vmem>>, %arg3: memref<32x128xbf16, #tpu.memory_space<vmem>>, %arg4: memref<1x64x128xf32, #tpu.memory_space<vmem>>, %arg5: memref<1x64x1xf32, #tpu.memory_space<vmem>>, %arg6: memref<1x64x1xi32, #tpu.memory_space<vmem>>) attributes {dimension_semantics = [#tpu.dimension_semantics<parallel>, #tpu.dimension_semantics<parallel>], iteration_bounds = array<i64: 2, 1>, scalar_prefetch = 0 : i64, scratch_operands = 0 : i64, tpu.core_type = #tpu.core_type<tc>, window_params = [{transform_indices = @transform_0, window_bounds = array<i64: 1, 64, 32>}, {pipeline_mode = #tpu.pipeline_mode<synchronous>, transform_indices = @transform_1, window_bounds = array<i64: 32, 128>}, {transform_indices = @transform_2, window_bounds = array<i64: 1, 64, 128>}, {transform_indices = @transform_3, window_bounds = array<i64: 1, 64, 1>}, {transform_indices = @transform_4, window_bounds = array<i64: 1, 64, 1>}]} {
    %c0 = arith.constant 0 : index
    %c0_0 = arith.constant 0 : index
    %c0_1 = arith.constant 0 : index
    %0 = vector.load %arg2[%c0, %c0_0, %c0_1] : memref<1x64x32xbf16, #tpu.memory_space<vmem>>, vector<1x64x32xbf16>
    %1 = vector.shape_cast %0 : vector<1x64x32xbf16> to vector<64x32xbf16>
    %2 = arith.extf %1 : vector<64x32xbf16> to vector<64x32xf32>
    %3 = arith.negf %2 : vector<64x32xf32>
    %4 = math.exp %3 : vector<64x32xf32>
    %cst = arith.constant 1.000000e+00 : f32
    %5 = vector.broadcast %cst : f32 to vector<64x32xf32>
    %6 = arith.addf %5, %4 : vector<64x32xf32>
    %7 = arith.divf %5, %6 : vector<64x32xf32>
    %8 = arith.truncf %7 : vector<64x32xf32> to vector<64x32xbf16>
    %c0_2 = arith.constant 0 : index
    %c0_3 = arith.constant 0 : index
    %9 = vector.load %arg3[%c0_2, %c0_3] : memref<32x128xbf16, #tpu.memory_space<vmem>>, vector<32x128xbf16>
    %cst_4 = arith.constant dense<0.000000e+00> : vector<64x128xf32>
    %10 = tpu.matmul %8, %9, %cst_4 {dimension_numbers = #tpu.dot_dimension_numbers<[1], [0], [0], [1], [0, 0, 1, 1], [], []>} : vector<64x32xbf16>, vector<32x128xbf16>, vector<64x128xf32> -> vector<64x128xf32>
    %c0_5 = arith.constant 0 : index
    %c0_6 = arith.constant 0 : index
    %c0_7 = arith.constant 0 : index
    %11 = vector.load %arg4[%c0_5, %c0_6, %c0_7] : memref<1x64x128xf32, #tpu.memory_space<vmem>>, vector<1x64x128xf32>
    %12 = vector.shape_cast %11 : vector<1x64x128xf32> to vector<64x128xf32>
    %13 = vector.shape_cast %10 : vector<64x128xf32> to vector<1x64x128xf32>
    tpu.vector_store %arg4[%c0_5, %c0_6, %c0_7], %13 {strides = array<i32>} : memref<1x64x128xf32, #tpu.memory_space<vmem>>, vector<1x64x128xf32>,
    %cst_8 = arith.constant dense<0xFF800000> : vector<64xf32>
    %14 = vector.multi_reduction <maximumf>, %10, %cst_8 [1] : vector<64x128xf32> to vector<64xf32>
    %15 = vector.shape_cast %14 : vector<64xf32> to vector<64x1xf32>
    %c0_9 = arith.constant 0 : index
    %c0_10 = arith.constant 0 : index
    %c0_11 = arith.constant 0 : index
    %16 = vector.load %arg5[%c0_9, %c0_10, %c0_11] : memref<1x64x1xf32, #tpu.memory_space<vmem>>, vector<1x64x1xf32>
    %17 = vector.shape_cast %16 : vector<1x64x1xf32> to vector<64x1xf32>
    %18 = vector.shape_cast %15 : vector<64x1xf32> to vector<1x64x1xf32>
    tpu.vector_store %arg5[%c0_9, %c0_10, %c0_11], %18 {strides = array<i32>} : memref<1x64x1xf32, #tpu.memory_space<vmem>>, vector<1x64x1xf32>,
    %19 = tpu.iota {dimensions = array<i32: 1>} : vector<64x128xi32>
    %20 = vector.broadcast %15 : vector<64x1xf32> to vector<64x128xf32>
    %21 = arith.cmpf oge, %10, %20 : vector<64x128xf32>
    %c128_i32 = arith.constant 128 : i32
    %22 = vector.broadcast %c128_i32 : i32 to vector<64x128xi32>
    %23 = arith.select %21, %19, %22 : vector<64x128xi1>, vector<64x128xi32>
    %cst_12 = arith.constant dense<2147483647> : vector<64xi32>
    %24 = vector.multi_reduction <minsi>, %23, %cst_12 [1] : vector<64x128xi32> to vector<64xi32>
    %25 = vector.shape_cast %24 : vector<64xi32> to vector<64x1xi32>
    %c0_13 = arith.constant 0 : index
    %c0_14 = arith.constant 0 : index
    %c0_15 = arith.constant 0 : index
    %26 = vector.load %arg6[%c0_13, %c0_14, %c0_15] : memref<1x64x1xi32, #tpu.memory_space<vmem>>, vector<1x64x1xi32>
    %27 = vector.shape_cast %26 : vector<1x64x1xi32> to vector<64x1xi32>
    %28 = vector.shape_cast %25 : vector<64x1xi32> to vector<1x64x1xi32>
    tpu.vector_store %arg6[%c0_13, %c0_14, %c0_15], %28 {strides = array<i32>} : memref<1x64x1xi32, #tpu.memory_space<vmem>>, vector<1x64x1xi32>,
    return
  }
  func.func @transform_0(%arg0: i32, %arg1: i32) -> (i32, i32, i32) {
    %c0_i32 = arith.constant 0 : i32
    %c0_i32_0 = arith.constant 0 : i32
    return %arg0, %arg1, %c0_i32 : i32, i32, i32
  }
  func.func @transform_1(%arg0: i32, %arg1: i32) -> (i32, i32) {
    %c0_i32 = arith.constant 0 : i32
    %c0_i32_0 = arith.constant 0 : i32
    %c0_i32_1 = arith.constant 0 : i32
    return %c0_i32, %c0_i32_0 : i32, i32
  }
  func.func @transform_2(%arg0: i32, %arg1: i32) -> (i32, i32, i32) {
    %c0_i32 = arith.constant 0 : i32
    %c0_i32_0 = arith.constant 0 : i32
    return %arg0, %arg1, %c0_i32 : i32, i32, i32
  }
  func.func @transform_3(%arg0: i32, %arg1: i32) -> (i32, i32, i32) {
    %c0_i32 = arith.constant 0 : i32
    %c0_i32_0 = arith.constant 0 : i32
    return %arg0, %arg1, %c0_i32 : i32, i32, i32
  }
  func.func @transform_4(%arg0: i32, %arg1: i32) -> (i32, i32, i32) {
    %c0_i32 = arith.constant 0 : i32
    %c0_i32_0 = arith.constant 0 : i32
    return %arg0, %arg1, %c0_i32 : i32, i32, i32
  }
}

</mosaic_0001>

<llo_original>
// kernel: tpu_custom_call.1
$region0: #{tpu_custom_call.1}
  #allocation0 [shape = 'u32[]', space=smem, size = 0x4, offset = 0x4, fixed_abs, tag = 'smem constant byte address 0x4 - core index']
  #allocation1 [shape = 'u32[144,128]{1,0:T(1,128)}', space=vmem, size = 0x12000, scoped, tag = 'internal scratch']
  %s0 = inlined_call_operand.vmem [shape: bf16[2,64,32], index: 0, kind: input, shape index: {}]
  %s1 = inlined_call_operand.vmem [shape: bf16[32,128], index: 1, kind: input, shape index: {}]
  %s2 = inlined_call_operand.hbm [shape: f32[2,64,128], index: 2, kind: output, shape index: {0}]
  %s3 = inlined_call_operand.vmem [shape: f32[2,64,1], index: 3, kind: output, shape index: {1}]
  %s4 = inlined_call_operand.vmem [shape: s32[2,64,1], index: 4, kind: output, shape index: {2}]
  %5 = xla_tuple %s2, %s3, %s4
  %s6 = sld [smem:[#allocation0]]
  $region57: #{tpu_custom_call.1} parent=0
    _
  %s8 = ssub.s32 1, %s6
  %s9 = scalar_select 0, %s8, %s6
  $region1: #{tpu_custom_call.1} parent=0
    #allocation2 [shape = 'u8[65536]{0}', space=vmem, size = 0x10000, scoped, tag = 'output window, operand 0']
    #allocation3 [shape = 's32[2]{0}', space=sflag, size = 0x8, scoped, tag = 'scoped memory for tpu_custom_call.1']
    %10 = vsyncpa [#allocation3], 0
    %s11 = scalar_lea.sflag [#allocation3], 1
    %12 = vsyncpa %s11, 0
    loop: start=0, step=1, limit=4
    $region2: #{tpu_custom_call.1} parent=1 // loop_pre_header
      _
    $region3: #{tpu_custom_call.1} parent=1 // loop_header
      %s14 = sphi 0, %s18
      %p15 = scmp.ge.s32.totalorder %s14, 4
      %s21 = sphi 0, %s33
      %s22 = sphi 0, %s29
      %s23 = sphi 0, %s21
      %s24 = sphi 0, %s22
      %s25 = sphi 0, %s23
      %s26 = sphi 0, %s24
      %s38 = sphi 0, %s40
      %s41 = sphi 0, %s38
      %s42 = sphi 0, %s41
      %s58 = sphi 0, %s42
      %s62 = sphi 0, %s62
      %s64 = sphi 0, %s62
      %s65 = sphi 0, %s64
      %s79 = sphi 0, %s65
      %s87 = sphi 0, %s89
      %s90 = sphi 0, %s87
      %s91 = sphi 0, %s90
      %s107 = sphi 0, %s91
      %s115 = sphi 0, %s117
      %s118 = sphi 0, %s115
      %s119 = sphi 0, %s118
      %s135 = sphi 0, %s119
      %s143 = sphi 0, %s145
      %s146 = sphi 0, %s143
      %s147 = sphi 0, %s146
      %s163 = sphi 0, %s147
    $region4: #{tpu_custom_call.1} parent=1 // loop_header_branch
      %17 = sbr.rel (%p15) target = $region8
    $region5: #{tpu_custom_call.1} parent=1 // loop_body
      %s19 = ssub.s32 %s14, 1
      %s20 = ssub.s32 %s14, 2
      %s27 = sadd.s32 1, %s22
      %p28 = scmp.ge.s32.totalorder %s27, 1
      %s29 = scalar_select %p28, 0, %s27
      %s30 = sadd.s32 1, %s21
      %s31 = scalar_select %p28, %s30, %s21
      %p32 = scmp.ge.s32.totalorder %s31, 2
      %s33 = scalar_select %p32, 0, %s31
      %s34 = ssub.s32 %s21, %s33
      %s35 = ssub.s32 %s22, %s29
      %s36 = sor.u32 %s34, %s35
      %p37 = scmp.eq.s32.totalorder %s36, 0
      %s39 = sadd.s32 %s38, 1
      %s40 = scalar_select %p37, %s38, %s39
      %p43 = pneg %p37
      %p44 = scmp.eq.s32.totalorder %s14, 1
      %p45 = por %p43, %p44
      %p46 = scmp.ne.s32.totalorder %s38, %s41
      %p47 = scmp.eq.s32.totalorder %s14, 0
      %p48 = por %p46, %p47
      %p49 = scmp.ne.s32.totalorder %s38, %s41
      %p50 = scmp.eq.s32.totalorder %s19, 1
      %p51 = por %p49, %p50
      %p52 = scmp.ne.s32.totalorder %s41, %s42
      %p53 = scmp.eq.s32.totalorder %s19, 0
      %p54 = por %p52, %p53
      %p55 = scmp.ne.s32.totalorder %s41, %s42
      %p56 = scmp.eq.s32.totalorder %s20, 1
      %p57 = por %p55, %p56
      %p59 = scmp.ne.s32.totalorder %s42, %s58
      %p60 = scmp.eq.s32.totalorder %s20, 0
      %p61 = por %p59, %p60
      %s63 = sadd.s32 %s62, 1
      %p66 = scmp.eq.s32.totalorder %s14, 1
      %p67 = scmp.ne.s32.totalorder %s62, %s64
      %p68 = scmp.eq.s32.totalorder %s14, 0
      %p69 = por %p67, %p68
      %p70 = scmp.ne.s32.totalorder %s62, %s64
      %p71 = scmp.eq.s32.totalorder %s19, 1
      %p72 = por %p70, %p71
      %p73 = scmp.ne.s32.totalorder %s64, %s65
      %p74 = scmp.eq.s32.totalorder %s19, 0
      %p75 = por %p73, %p74
      %p76 = scmp.ne.s32.totalorder %s64, %s65
      %p77 = scmp.eq.s32.totalorder %s20, 1
      %p78 = por %p76, %p77
      %p80 = scmp.ne.s32.totalorder %s65, %s79
      %p81 = scmp.eq.s32.totalorder %s20, 0
      %p82 = por %p80, %p81
      %s83 = ssub.s32 %s21, %s33
      %s84 = ssub.s32 %s22, %s29
      %s85 = sor.u32 %s83, %s84
      %p86 = scmp.eq.s32.totalorder %s85, 0
      %s88 = sadd.s32 %s87, 1
      %s89 = scalar_select %p86, %s87, %s88
      %p92 = pneg %p86
      %p93 = scmp.eq.s32.totalorder %s14, 1
      %p94 = por %p92, %p93
      %p95 = scmp.ne.s32.totalorder %s87, %s90
      %p96 = scmp.eq.s32.totalorder %s14, 0
      %p97 = por %p95, %p96
      %p98 = scmp.ne.s32.totalorder %s87, %s90
      %p99 = scmp.eq.s32.totalorder %s19, 1
      %p100 = por %p98, %p99
      %p101 = scmp.ne.s32.totalorder %s90, %s91
      %p102 = scmp.eq.s32.totalorder %s19, 0
      %p103 = por %p101, %p102
      %p104 = scmp.ne.s32.totalorder %s90, %s91
      %p105 = scmp.eq.s32.totalorder %s20, 1
      %p106 = por %p104, %p105
      %p108 = scmp.ne.s32.totalorder %s91, %s107
      %p109 = scmp.eq.s32.totalorder %s20, 0
      %p110 = por %p108, %p109
      %s111 = ssub.s32 %s21, %s33
      %s112 = ssub.s32 %s22, %s29
      %s113 = sor.u32 %s111, %s112
      %p114 = scmp.eq.s32.totalorder %s113, 0
      %s116 = sadd.s32 %s115, 1
      %s117 = scalar_select %p114, %s115, %s116
      %p120 = pneg %p114
      %p121 = scmp.eq.s32.totalorder %s14, 1
      %p122 = por %p120, %p121
      %p123 = scmp.ne.s32.totalorder %s115, %s118
      %p124 = scmp.eq.s32.totalorder %s14, 0
      %p125 = por %p123, %p124
      %p126 = scmp.ne.s32.totalorder %s115, %s118
      %p127 = scmp.eq.s32.totalorder %s19, 1
      %p128 = por %p126, %p127
      %p129 = scmp.ne.s32.totalorder %s118, %s119
      %p130 = scmp.eq.s32.totalorder %s19, 0
      %p131 = por %p129, %p130
      %p132 = scmp.ne.s32.totalorder %s118, %s119
      %p133 = scmp.eq.s32.totalorder %s20, 1
      %p134 = por %p132, %p133
      %p136 = scmp.ne.s32.totalorder %s119, %s135
      %p137 = scmp.eq.s32.totalorder %s20, 0
      %p138 = por %p136, %p137
      %s139 = ssub.s32 %s21, %s33
      %s140 = ssub.s32 %s22, %s29
      %s141 = sor.u32 %s139, %s140
      %p142 = scmp.eq.s32.totalorder %s141, 0
      %s144 = sadd.s32 %s143, 1
      %s145 = scalar_select %p142, %s143, %s144
      %p148 = pneg %p142
      %p149 = scmp.eq.s32.totalorder %s14, 1
      %p150 = por %p148, %p149
      %p151 = scmp.ne.s32.totalorder %s143, %s146
      %p152 = scmp.eq.s32.totalorder %s14, 0
      %p153 = por %p151, %p152
      %p154 = scmp.ne.s32.totalorder %s143, %s146
      %p155 = scmp.eq.s32.totalorder %s19, 1
      %p156 = por %p154, %p155
      %p157 = scmp.ne.s32.totalorder %s146, %s147
      %p158 = scmp.eq.s32.totalorder %s19, 0
      %p159 = por %p157, %p158
      %p160 = scmp.ne.s32.totalorder %s146, %s147
      %p161 = scmp.eq.s32.totalorder %s20, 1
      %p162 = por %p160, %p161
      %p164 = scmp.ne.s32.totalorder %s147, %s163
      %p165 = scmp.eq.s32.totalorder %s20, 0
      %p166 = por %p164, %p165
      %p167 = scmp.le.s32.totalorder 1, %s14
      %p168 = scmp.lt.s32.totalorder %s14, 3
      %p169 = pnand %p167, %p168
      %p170 = pneg %p169
      // Predicated region
      $region9: #{tpu_custom_call.1} parent=5 // pred_check
        _
      $region10: #{tpu_custom_call.1} parent=5 // pred_check_branch
        %172 = sbr.rel (%p169) target = $region12
      $region11: #{tpu_custom_call.1} parent=5 // pred_region
        %s173 = ssub.s32 %s14, 1
        // Predicated region
        $region13: #{tpu_custom_call.1} parent=11 // pred_check
          %p174 = pneg %p75
        $region14: #{tpu_custom_call.1} parent=11 // pred_check_branch
          %176 = sbr.rel (%p174) target = $region16
        $region15: #{tpu_custom_call.1} parent=11 // pred_region
          _
        $region16: #{tpu_custom_call.1} parent=11 // pred_fallthru
          _
      $region12: #{tpu_custom_call.1} parent=5 // pred_fallthru
        _
      %p177 = scmp.lt.s32.totalorder %s14, 2
      // Predicated region
      $region17: #{tpu_custom_call.1} parent=5 // pred_check
        %p178 = pneg %p177
      $region18: #{tpu_custom_call.1} parent=5 // pred_check_branch
        %180 = sbr.rel (%p178) target = $region20
      $region19: #{tpu_custom_call.1} parent=5 // pred_region
        // Predicated region
        $region21: #{tpu_custom_call.1} parent=19 // pred_check
          %p181 = pneg %p48
        $region22: #{tpu_custom_call.1} parent=19 // pred_check_branch
          %183 = sbr.rel (%p181) target = $region24
        $region23: #{tpu_custom_call.1} parent=19 // pred_region
          %s184 = smul.u32 8, %s22
          %p185 = scmp.lt.s32.totalorder %s21, 1
          %s186 = scalar_select %p185, %s21, 1
          %p187 = scmp.lt.s32.totalorder %s184, 7
          %s188 = scalar_select %p187, %s184, 7
          %s189 = smul.addr %s186, 8
          %s190 = sadd.s32 %s188, %s189
          %s191 = smul.addr %s190, 4
          %s192 = scalar_lea.vmem %s0, %s191
          %s193 = smul.u32 8, %s22
        $region24: #{tpu_custom_call.1} parent=19 // pred_fallthru
          _
      $region20: #{tpu_custom_call.1} parent=5 // pred_fallthru
        _
      %p194 = scmp.le.s32.totalorder 1, %s14
      %p195 = scmp.lt.s32.totalorder %s14, 3
      %p196 = pnand %p194, %p195
      %p197 = pneg %p196
      // Predicated region
      $region25: #{tpu_custom_call.1} parent=5 // pred_check
        _
      $region26: #{tpu_custom_call.1} parent=5 // pred_check_branch
        %199 = sbr.rel (%p196) target = $region28
      $region27: #{tpu_custom_call.1} parent=5 // pred_region
        %s200 = ssub.s32 %s14, 1
        %s201 = smul.u32 8, %s24
        %p202 = scmp.lt.s32.totalorder %s23, 1
        %s203 = scalar_select %p202, %s23, 1
        %p204 = scmp.lt.s32.totalorder %s201, 7
        %s205 = scalar_select %p204, %s201, 7
        %s206 = smul.addr %s203, 8
        %s207 = sadd.s32 %s205, %s206
        %s208 = smul.addr %s207, 4
        %s209 = scalar_lea.vmem %s0, %s208
        %p210 = pneg %p54
        %p211 = pneg %p51
        %p212 = pneg %p75
        %p213 = pneg %p72
        %p214 = pneg %p103
        %p215 = pneg %p100
        %s216 = sand.u32 %s90, 1
        %s217 = scalar_lea.sflag [#allocation3], %s216
        %s218 = sand.u32 %s90, 1
        %s219 = smul.addr %s218, 64
        %s220 = scalar_lea.vmem [#allocation2], %s219
        %p221 = pneg %p131
        %p222 = pneg %p128
        %s223 = smul.u32 8, %s24
        %p224 = scmp.lt.s32.totalorder %s23, 1
        %s225 = scalar_select %p224, %s23, 1
        %p226 = scmp.lt.s32.totalorder %s223, 7
        %s227 = scalar_select %p226, %s223, 7
        %s228 = smul.addr %s225, 8
        %s229 = sadd.s32 %s227, %s228
        %s230 = smul.addr %s229, 8
        %s231 = scalar_lea.vmem %s3, %s230
        %p232 = pneg %p159
        %p233 = pneg %p156
        %s234 = smul.u32 8, %s24
        %p235 = scmp.lt.s32.totalorder %s23, 1
        %s236 = scalar_select %p235, %s23, 1
        %p237 = scmp.lt.s32.totalorder %s234, 7
        %s238 = scalar_select %p237, %s234, 7
        %s239 = smul.addr %s236, 8
        %s240 = sadd.s32 %s238, %s239
        %s241 = smul.addr %s240, 8
        %s242 = scalar_lea.vmem %s4, %s241
        %s243 = smul.u32 8, %s24
        %p244 = scmp.lt.s32.totalorder %s23, 1
        %s245 = scalar_select %p244, %s23, 1
        %p246 = scmp.lt.s32.totalorder %s243, 7
        %s247 = scalar_select %p246, %s243, 7
        %s248 = smul.addr %s245, 8
        %s249 = sadd.s32 %s247, %s248
        %s250 = smul.addr %s249, 4
        %s251 = scalar_lea.vmem %s0, %s250
        %s252 = smul.u32 8, %s24
        %s253 = smul.u32 8, %s24
        %s254 = smul.u32 8, %s24
        %p255 = scmp.lt.s32.totalorder %s23, 1
        %s256 = scalar_select %p255, %s23, 1
        %p257 = scmp.lt.s32.totalorder %s254, 7
        %s258 = scalar_select %p257, %s254, 7
        %s259 = smul.addr %s256, 8
        %s260 = sadd.s32 %s258, %s259
        %s261 = smul.addr %s260, 8
        %s262 = scalar_lea.vmem %s3, %s261
        %s263 = smul.u32 8, %s24
        %s264 = smul.u32 8, %s24
        %p265 = scmp.lt.s32.totalorder %s23, 1
        %s266 = scalar_select %p265, %s23, 1
        %p267 = scmp.lt.s32.totalorder %s264, 7
        %s268 = scalar_select %p267, %s264, 7
        %s269 = smul.addr %s266, 8
        %s270 = sadd.s32 %s268, %s269
        %s271 = smul.addr %s270, 8
        %s272 = scalar_lea.vmem %s4, %s271
        %s273 = smul.u32 8, %s24
        %v275 = vld [vmem:[%s251] sm:$0xf]
        %v276 = vld [vmem:[%s251 + $0x4] sm:$0xf]
        %v277 = vld [vmem:[%s251 + $0x8] sm:$0xf]
        %v278 = vld [vmem:[%s251 + $0xc] sm:$0xf]
        %v279 = vld [vmem:[%s251 + $0x10] sm:$0xf]
        %v280 = vld [vmem:[%s251 + $0x14] sm:$0xf]
        %v281 = vld [vmem:[%s251 + $0x18] sm:$0xf]
        %v282 = vld [vmem:[%s251 + $0x1c] sm:$0xf]
        %v283 = vunpack.c.l.bf16 %v275
        %v284 = vunpack.c.l.bf16 %v276
        %v285 = vunpack.c.l.bf16 %v277
        %v286 = vunpack.c.l.bf16 %v278
        %v287 = vunpack.c.l.bf16 %v279
        %v288 = vunpack.c.l.bf16 %v280
        %v289 = vunpack.c.l.bf16 %v281
        %v290 = vunpack.c.l.bf16 %v282
        %v291 = vxor.u32 %v283, 2147483648
        %v292 = vxor.u32 %v284, 2147483648
        %v293 = vxor.u32 %v285, 2147483648
        %v294 = vxor.u32 %v286, 2147483648
        %v295 = vxor.u32 %v287, 2147483648
        %v296 = vxor.u32 %v288, 2147483648
        %v297 = vxor.u32 %v289, 2147483648
        %v298 = vxor.u32 %v290, 2147483648
        %v299 = vmul.f32 %v291, 1.442695
        %v300 = vpow.pop %v299
        %v301 = vmul.f32 %v292, 1.442695
        %v302 = vpow.pop %v301
        %v303 = vmul.f32 %v293, 1.442695
        %v304 = vpow.pop %v303
        %v305 = vmul.f32 %v294, 1.442695
        %v306 = vpow.pop %v305
        %v307 = vmul.f32 %v295, 1.442695
        %v308 = vpow.pop %v307
        %v309 = vmul.f32 %v296, 1.442695
        %v310 = vpow.pop %v309
        %v311 = vmul.f32 %v297, 1.442695
        %v312 = vpow.pop %v311
        %v313 = vmul.f32 %v298, 1.442695
        %v314 = vpow.pop %v313
        %v315 = vadd.f32 %v300, 1.0
        %v316 = vadd.f32 %v302, 1.0
        %v317 = vadd.f32 %v304, 1.0
        %v318 = vadd.f32 %v306, 1.0
        %v319 = vadd.f32 %v308, 1.0
        %v320 = vadd.f32 %v310, 1.0
        %v321 = vadd.f32 %v312, 1.0
        %v322 = vadd.f32 %v314, 1.0
        %v323 = vrcp.pop %v315
        %v324 = vmul.f32 1.0, %v323
        %v325 = vrcp.pop %v316
        %v326 = vmul.f32 1.0, %v325
        %v327 = vrcp.pop %v317
        %v328 = vmul.f32 1.0, %v327
        %v329 = vrcp.pop %v318
        %v330 = vmul.f32 1.0, %v329
        %v331 = vrcp.pop %v319
        %v332 = vmul.f32 1.0, %v331
        %v333 = vrcp.pop %v320
        %v334 = vmul.f32 1.0, %v333
        %v335 = vrcp.pop %v321
        %v336 = vmul.f32 1.0, %v335
        %v337 = vrcp.pop %v322
        %v338 = vmul.f32 1.0, %v337
        %v339 = vpack.c.bf16 %v326, %v324
        %v340 = vpack.c.bf16 %v330, %v328
        %v341 = vpack.c.bf16 %v334, %v332
        %v342 = vpack.c.bf16 %v338, %v336
        %v343 = vld [vmem:[%s1] sm:$0xf]
        %v344 = vld [vmem:[%s1 + $0x4] sm:$0xf]
        %v345 = vld [vmem:[%s1 + $0x8] sm:$0xf]
        %v346 = vld [vmem:[%s1 + $0xc] sm:$0xf]
        %v351 = vunpack.c.l.b16 %v343
        %v352 = vunpack.c.l.b16 %v344
        %v353 = vunpack.c.l.b16 %v345
        %v354 = vunpack.c.l.b16 %v346
        %v355 = vpack.c.b16 %v352, %v351
        %v356 = vpack.c.b16 %v354, %v353
        %vm359 = vcmask 261120
        %v361 = vsel %vm359, %v339, 0
        %v364 = vsel %vm359, %v340, 0
        %v367 = vsel %vm359, %v341, 0
        %v370 = vsel %vm359, %v342, 0
        %372 = vmatprep.subr.bf16.mxu0 0
        %373 = vmatpush1.bf16.msra.mxu0 %v355
        %374 = vmatprep.subr.bf16.mxu0 0
        %375 = vmatpush1.bf16.msra.mxu0 %v356
        %376 = vmatprep.subr.bf16.mxu0 0
        %377 = vmatpush1.bf16.msra.mxu0 0
        %378 = vmatprep.subr.bf16.mxu0 0
        %379 = vmatpush1.bf16.msra.mxu0 0
        %380 = vmatprep.subr.bf16.mxu0 0
        %381 = vmatpush1.bf16.msra.mxu0 0
        %382 = vmatprep.subr.bf16.mxu0 0
        %383 = vmatpush1.bf16.msra.mxu0 0
        %384 = vmatprep.subr.bf16.mxu0 0
        %385 = vmatpush1.bf16.msra.mxu0 0
        %386 = vmatprep.subr.bf16.mxu0 0
        %387 = vmatpush1.bf16.msra.mxu0 0
        %388 = vmatprep.subr.bf16.mxu0 0
        %389 = vmatpush1.bf16.msra.mxu0 0
        %390 = vmatprep.subr.bf16.mxu0 0
        %391 = vmatpush1.bf16.msra.mxu0 0
        %392 = vmatprep.subr.bf16.mxu0 0
        %393 = vmatpush1.bf16.msra.mxu0 0
        %394 = vmatprep.subr.bf16.mxu0 0
        %395 = vmatpush1.bf16.msra.mxu0 0
        %396 = vmatprep.subr.bf16.mxu0 0
        %397 = vmatpush1.bf16.msra.mxu0 0
        %398 = vmatprep.subr.bf16.mxu0 0
        %399 = vmatpush1.bf16.msra.mxu0 0
        %400 = vmatprep.subr.bf16.mxu0 0
        %401 = vmatpush1.bf16.msra.mxu0 0
        %402 = vmatprep.subr.bf16.mxu0 0
        %403 = vmatpush1.bf16.msra.mxu0 0
        %404 = vmatprep.mubr.bf16.mxu0 0
        %405 = vmatmul.mubr.bf16.gmra.mrb[0].mxu0 %v361
        %v406 = vpop.f32.mrb[0].mxu0
        %v407 = vadd.f32 0.0, %v406
        %v408 = vpop.f32.mrb[0].mxu0
        %v409 = vpop.f32.mrb[0].mxu0
        %v410 = vadd.f32 0.0, %v409
        %v411 = vpop.f32.mrb[0].mxu0
        %412 = vmatprep.mubr.bf16.mxu0 0
        %413 = vmatmul.mubr.bf16.gmra.mrb[0].mxu0 %v364
        %v414 = vpop.f32.mrb[0].mxu0
        %v415 = vadd.f32 0.0, %v414
        %v416 = vpop.f32.mrb[0].mxu0
        %v417 = vpop.f32.mrb[0].mxu0
        %v418 = vadd.f32 0.0, %v417
        %v419 = vpop.f32.mrb[0].mxu0
        %420 = vmatprep.mubr.bf16.mxu0 0
        %421 = vmatmul.mubr.bf16.gmra.mrb[0].mxu0 %v367
        %v422 = vpop.f32.mrb[0].mxu0
        %v423 = vadd.f32 0.0, %v422
        %v424 = vpop.f32.mrb[0].mxu0
        %v425 = vpop.f32.mrb[0].mxu0
        %v426 = vadd.f32 0.0, %v425
        %v427 = vpop.f32.mrb[0].mxu0
        %428 = vmatprep.mubr.bf16.mxu0 0
        %429 = vmatmul.mubr.bf16.gmra.mrb[0].mxu0 %v370
        %v430 = vpop.f32.mrb[0].mxu0
        %v431 = vadd.f32 0.0, %v430
        %v432 = vpop.f32.mrb[0].mxu0
        %v433 = vpop.f32.mrb[0].mxu0
        %v434 = vadd.f32 0.0, %v433
        %v435 = vpop.f32.mrb[0].mxu0
        %436 = vdwg.mxu0
        %437 = vst [vmem:[%s220] sm:$0xff] %v407
        %438 = vst [vmem:[%s220 + $0x8] sm:$0xff] %v410
        %439 = vst [vmem:[%s220 + $0x10] sm:$0xff] %v415
        %440 = vst [vmem:[%s220 + $0x18] sm:$0xff] %v418
        %441 = vst [vmem:[%s220 + $0x20] sm:$0xff] %v423
        %442 = vst [vmem:[%s220 + $0x28] sm:$0xff] %v426
        %443 = vst [vmem:[%s220 + $0x30] sm:$0xff] %v431
        %444 = vst [vmem:[%s220 + $0x38] sm:$0xff] %v434
        %445 = vmax.xlane.f32.xlu0 %v407
        %v446 = vpop.xlane.xlu0 %445
        %447 = vmax.xlane.f32.xlu0 %v410
        %v448 = vpop.xlane.xlu0 %447
        %449 = vmax.xlane.f32.xlu0 %v415
        %v450 = vpop.xlane.xlu0 %449
        %451 = vmax.xlane.f32.xlu0 %v418
        %v452 = vpop.xlane.xlu0 %451
        %453 = vmax.xlane.f32.xlu0 %v423
        %v454 = vpop.xlane.xlu0 %453
        %455 = vmax.xlane.f32.xlu0 %v426
        %v456 = vpop.xlane.xlu0 %455
        %457 = vmax.xlane.f32.xlu0 %v431
        %v458 = vpop.xlane.xlu0 %457
        %459 = vmax.xlane.f32.xlu0 %v434
        %v460 = vpop.xlane.xlu0 %459
        %vm461 = vcmask 7168
        %462 = vst.msk [vmem:[%s262] sm:$0xff] %vm461, %v446
        %463 = vst.msk [vmem:[%s262 + $0x8] sm:$0xff] %vm461, %v448
        %464 = vst.msk [vmem:[%s262 + $0x10] sm:$0xff] %vm461, %v450
        %465 = vst.msk [vmem:[%s262 + $0x18] sm:$0xff] %vm461, %v452
        %466 = vst.msk [vmem:[%s262 + $0x20] sm:$0xff] %vm461, %v454
        %467 = vst.msk [vmem:[%s262 + $0x28] sm:$0xff] %vm461, %v456
        %468 = vst.msk [vmem:[%s262 + $0x30] sm:$0xff] %vm461, %v458
        %469 = vst.msk [vmem:[%s262 + $0x38] sm:$0xff] %vm461, %v460
        %v470 = vlaneseq
        %v471 = vand.u32 %v470, 127
        %vm472 = vcmp.ge.f32.partialorder %v407, %v446
        %vm473 = vcmp.ge.f32.partialorder %v410, %v448
        %vm474 = vcmp.ge.f32.partialorder %v415, %v450
        %vm475 = vcmp.ge.f32.partialorder %v418, %v452
        %vm476 = vcmp.ge.f32.partialorder %v423, %v454
        %vm477 = vcmp.ge.f32.partialorder %v426, %v456
        %vm478 = vcmp.ge.f32.partialorder %v431, %v458
        %vm479 = vcmp.ge.f32.partialorder %v434, %v460
        %v480 = vsel %vm472, %v471, 128
        %v481 = vsel %vm473, %v471, 128
        %v482 = vsel %vm474, %v471, 128
        %v483 = vsel %vm475, %v471, 128
        %v484 = vsel %vm476, %v471, 128
        %v485 = vsel %vm477, %v471, 128
        %v486 = vsel %vm478, %v471, 128
        %v487 = vsel %vm479, %v471, 128
        %v488 = vand.u32 %v480, 65535
        %v489 = vshra.s32 %v480, 16
        %v490 = vcvt.s32.f32 %v488
        %v491 = vcvt.s32.f32 %v489
        %492 = vmin.xlane.f32.xlu0 %v491
        %v493 = vpop.xlane.xlu0 %492
        %vm494 = vcmp.eq.f32.partialorder %v491, %v493
        %v495 = vsel %vm494, %v490, inf
        %496 = vmin.xlane.f32.xlu0 %v495
        %v497 = vpop.xlane.xlu0 %496
        %v498 = vcvt.f32.s32 %v497
        %v499 = vcvt.f32.s32 %v493
        %v500 = vshll.u32 %v499, 16
        %v501 = vadd.s32 %v500, %v498
        %v502 = vand.u32 %v481, 65535
        %v503 = vshra.s32 %v481, 16
        %v504 = vcvt.s32.f32 %v502
        %v505 = vcvt.s32.f32 %v503
        %506 = vmin.xlane.f32.xlu0 %v505
        %v507 = vpop.xlane.xlu0 %506
        %vm508 = vcmp.eq.f32.partialorder %v505, %v507
        %v509 = vsel %vm508, %v504, inf
        %510 = vmin.xlane.f32.xlu0 %v509
        %v511 = vpop.xlane.xlu0 %510
        %v512 = vcvt.f32.s32 %v511
        %v513 = vcvt.f32.s32 %v507
        %v514 = vshll.u32 %v513, 16
        %v515 = vadd.s32 %v514, %v512
        %v516 = vand.u32 %v482, 65535
        %v517 = vshra.s32 %v482, 16
        %v518 = vcvt.s32.f32 %v516
        %v519 = vcvt.s32.f32 %v517
        %520 = vmin.xlane.f32.xlu0 %v519
        %v521 = vpop.xlane.xlu0 %520
        %vm522 = vcmp.eq.f32.partialorder %v519, %v521
        %v523 = vsel %vm522, %v518, inf
        %524 = vmin.xlane.f32.xlu0 %v523
        %v525 = vpop.xlane.xlu0 %524
        %v526 = vcvt.f32.s32 %v525
        %v527 = vcvt.f32.s32 %v521
        %v528 = vshll.u32 %v527, 16
        %v529 = vadd.s32 %v528, %v526
        %v530 = vand.u32 %v483, 65535
        %v531 = vshra.s32 %v483, 16
        %v532 = vcvt.s32.f32 %v530
        %v533 = vcvt.s32.f32 %v531
        %534 = vmin.xlane.f32.xlu0 %v533
        %v535 = vpop.xlane.xlu0 %534
        %vm536 = vcmp.eq.f32.partialorder %v533, %v535
        %v537 = vsel %vm536, %v532, inf
        %538 = vmin.xlane.f32.xlu0 %v537
        %v539 = vpop.xlane.xlu0 %538
        %v540 = vcvt.f32.s32 %v539
        %v541 = vcvt.f32.s32 %v535
        %v542 = vshll.u32 %v541, 16
        %v543 = vadd.s32 %v542, %v540
        %v544 = vand.u32 %v484, 65535
        %v545 = vshra.s32 %v484, 16
        %v546 = vcvt.s32.f32 %v544
        %v547 = vcvt.s32.f32 %v545
        %548 = vmin.xlane.f32.xlu0 %v547
        %v549 = vpop.xlane.xlu0 %548
        %vm550 = vcmp.eq.f32.partialorder %v547, %v549
        %v551 = vsel %vm550, %v546, inf
        %552 = vmin.xlane.f32.xlu0 %v551
        %v553 = vpop.xlane.xlu0 %552
        %v554 = vcvt.f32.s32 %v553
        %v555 = vcvt.f32.s32 %v549
        %v556 = vshll.u32 %v555, 16
        %v557 = vadd.s32 %v556, %v554
        %v558 = vand.u32 %v485, 65535
        %v559 = vshra.s32 %v485, 16
        %v560 = vcvt.s32.f32 %v558
        %v561 = vcvt.s32.f32 %v559
        %562 = vmin.xlane.f32.xlu0 %v561
        %v563 = vpop.xlane.xlu0 %562
        %vm564 = vcmp.eq.f32.partialorder %v561, %v563
        %v565 = vsel %vm564, %v560, inf
        %566 = vmin.xlane.f32.xlu0 %v565
        %v567 = vpop.xlane.xlu0 %566
        %v568 = vcvt.f32.s32 %v567
        %v569 = vcvt.f32.s32 %v563
        %v570 = vshll.u32 %v569, 16
        %v571 = vadd.s32 %v570, %v568
        %v572 = vand.u32 %v486, 65535
        %v573 = vshra.s32 %v486, 16
        %v574 = vcvt.s32.f32 %v572
        %v575 = vcvt.s32.f32 %v573
        %576 = vmin.xlane.f32.xlu0 %v575
        %v577 = vpop.xlane.xlu0 %576
        %vm578 = vcmp.eq.f32.partialorder %v575, %v577
        %v579 = vsel %vm578, %v574, inf
        %580 = vmin.xlane.f32.xlu0 %v579
        %v581 = vpop.xlane.xlu0 %580
        %v582 = vcvt.f32.s32 %v581
        %v583 = vcvt.f32.s32 %v577
        %v584 = vshll.u32 %v583, 16
        %v585 = vadd.s32 %v584, %v582
        %v586 = vand.u32 %v487, 65535
        %v587 = vshra.s32 %v487, 16
        %v588 = vcvt.s32.f32 %v586
        %v589 = vcvt.s32.f32 %v587
        %590 = vmin.xlane.f32.xlu0 %v589
        %v591 = vpop.xlane.xlu0 %590
        %vm592 = vcmp.eq.f32.partialorder %v589, %v591
        %v593 = vsel %vm592, %v588, inf
        %594 = vmin.xlane.f32.xlu0 %v593
        %v595 = vpop.xlane.xlu0 %594
        %v596 = vcvt.f32.s32 %v595
        %v597 = vcvt.f32.s32 %v591
        %v598 = vshll.u32 %v597, 16
        %v599 = vadd.s32 %v598, %v596
        %600 = vst.msk [vmem:[%s272] sm:$0xff] %vm461, %v501
        %601 = vst.msk [vmem:[%s272 + $0x8] sm:$0xff] %vm461, %v515
        %602 = vst.msk [vmem:[%s272 + $0x10] sm:$0xff] %vm461, %v529
        %603 = vst.msk [vmem:[%s272 + $0x18] sm:$0xff] %vm461, %v543
        %604 = vst.msk [vmem:[%s272 + $0x20] sm:$0xff] %vm461, %v557
        %605 = vst.msk [vmem:[%s272 + $0x28] sm:$0xff] %vm461, %v571
        %606 = vst.msk [vmem:[%s272 + $0x30] sm:$0xff] %vm461, %v585
        %607 = vst.msk [vmem:[%s272 + $0x38] sm:$0xff] %vm461, %v599
        %s608 = sand.u32 %s90, 1
        %s609 = scalar_lea.sflag [#allocation3], %s608
        %s610 = sand.u32 %s90, 1
        %s611 = smul.addr %s610, 64
        %s612 = scalar_lea.vmem [#allocation2], %s611
        %s613 = smul.u32 8, %s24
        %p614 = scmp.lt.s32.totalorder %s23, 1
        %s615 = scalar_select %p614, %s23, 1
        %p616 = scmp.lt.s32.totalorder %s613, 7
        %s617 = scalar_select %p616, %s613, 7
        %s618 = smul.addr %s615, 8
        %s619 = sadd.s32 %s617, %s618
        %s620 = smul.addr %s619, 8
        %s621 = scalar_lea.vmem %s3, %s620
        %s622 = smul.u32 8, %s24
        %p623 = scmp.lt.s32.totalorder %s23, 1
        %s624 = scalar_select %p623, %s23, 1
        %p625 = scmp.lt.s32.totalorder %s622, 7
        %s626 = scalar_select %p625, %s622, 7
        %s627 = smul.addr %s624, 8
        %s628 = sadd.s32 %s626, %s627
        %s629 = smul.addr %s628, 8
        %s630 = scalar_lea.vmem %s4, %s629
        // Predicated region
        $region29: #{tpu_custom_call.1} parent=27 // pred_check
          %p631 = pneg %p100
        $region30: #{tpu_custom_call.1} parent=27 // pred_check_branch
          %633 = sbr.rel (%p631) target = $region32
        $region31: #{tpu_custom_call.1} parent=27 // pred_region
          %s634 = smul.u32 8, %s24
          %s636 = ssub.s32 1024, 1024
          %637 = vsyncadd %s609, %s636
          %s638 = smul.addr %s23, 8
          %s639 = sadd.s32 %s634, %s638
          %s640 = smul.addr %s639, 128
          %s641 = scalar_lea.hbm %s2, %s640
          %s642 = sshll.u32 %s612, 4
          %s643 = int_to_ptr.vmem [resolvable:$true] %s642
          %648 = dma.vmem_to_hbm [thread:$0]  %s643, 1024, %s641, %s609, 128, 128, 8
        $region32: #{tpu_custom_call.1} parent=27 // pred_fallthru
          _
        // Predicated region
        $region33: #{tpu_custom_call.1} parent=27 // pred_check
          %p649 = pneg %p128
        $region34: #{tpu_custom_call.1} parent=27 // pred_check_branch
          %651 = sbr.rel (%p649) target = $region36
        $region35: #{tpu_custom_call.1} parent=27 // pred_region
          %s652 = smul.u32 8, %s24
        $region36: #{tpu_custom_call.1} parent=27 // pred_fallthru
          _
        // Predicated region
        $region37: #{tpu_custom_call.1} parent=27 // pred_check
          %p653 = pneg %p156
        $region38: #{tpu_custom_call.1} parent=27 // pred_check_branch
          %655 = sbr.rel (%p653) target = $region40
        $region39: #{tpu_custom_call.1} parent=27 // pred_region
          %s656 = smul.u32 8, %s24
        $region40: #{tpu_custom_call.1} parent=27 // pred_fallthru
          _
      $region28: #{tpu_custom_call.1} parent=5 // pred_fallthru
        _
      %p657 = scmp.le.s32.totalorder 2, %s14
      // Predicated region
      $region41: #{tpu_custom_call.1} parent=5 // pred_check
        %p658 = pneg %p657
      $region42: #{tpu_custom_call.1} parent=5 // pred_check_branch
        %660 = sbr.rel (%p658) target = $region44
      $region43: #{tpu_custom_call.1} parent=5 // pred_region
        %s661 = ssub.s32 %s14, 2
        // Predicated region
        $region45: #{tpu_custom_call.1} parent=43 // pred_check
          %p662 = pneg %p106
        $region46: #{tpu_custom_call.1} parent=43 // pred_check_branch
          %664 = sbr.rel (%p662) target = $region48
        $region47: #{tpu_custom_call.1} parent=43 // pred_region
          %s665 = sand.u32 %s91, 1
          %s666 = scalar_lea.sflag [#allocation3], %s665
          %s667 = sand.u32 %s91, 1
          %s668 = smul.addr %s667, 64
          %s669 = scalar_lea.vmem [#allocation2], %s668
          %670 = dma.done %s666, 1024
        $region48: #{tpu_custom_call.1} parent=43 // pred_fallthru
          _
        // Predicated region
        $region49: #{tpu_custom_call.1} parent=43 // pred_check
          %p671 = pneg %p134
        $region50: #{tpu_custom_call.1} parent=43 // pred_check_branch
          %673 = sbr.rel (%p671) target = $region52
        $region51: #{tpu_custom_call.1} parent=43 // pred_region
          %s674 = smul.u32 8, %s26
          %p675 = scmp.lt.s32.totalorder %s25, 1
          %s676 = scalar_select %p675, %s25, 1
          %p677 = scmp.lt.s32.totalorder %s674, 7
          %s678 = scalar_select %p677, %s674, 7
          %s679 = smul.addr %s676, 8
          %s680 = sadd.s32 %s678, %s679
          %s681 = smul.addr %s680, 8
          %s682 = scalar_lea.vmem %s3, %s681
        $region52: #{tpu_custom_call.1} parent=43 // pred_fallthru
          _
        // Predicated region
        $region53: #{tpu_custom_call.1} parent=43 // pred_check
          %p683 = pneg %p162
        $region54: #{tpu_custom_call.1} parent=43 // pred_check_branch
          %685 = sbr.rel (%p683) target = $region56
        $region55: #{tpu_custom_call.1} parent=43 // pred_region
          %s686 = smul.u32 8, %s26
          %p687 = scmp.lt.s32.totalorder %s25, 1
          %s688 = scalar_select %p687, %s25, 1
          %p689 = scmp.lt.s32.totalorder %s686, 7
          %s690 = scalar_select %p689, %s686, 7
          %s691 = smul.addr %s688, 8
          %s692 = sadd.s32 %s690, %s691
          %s693 = smul.addr %s692, 8
          %s694 = scalar_lea.vmem %s4, %s693
        $region56: #{tpu_custom_call.1} parent=43 // pred_fallthru
          _
      $region44: #{tpu_custom_call.1} parent=5 // pred_fallthru
        _
    $region6: #{tpu_custom_call.1} parent=1 // loop_footer
      %s18 = sadd.s32 1, %s14
    $region7: #{tpu_custom_call.1} parent=1 // loop_footer_branch
      %13 = sbr.rel target = $region3
    $region8: #{tpu_custom_call.1} parent=1 // loop_exit
      _
    %695 = vsyncpa [#allocation3], 1
    %s696 = scalar_lea.sflag [#allocation3], 1
    %697 = vsyncpa %s696, 1

</llo_original>
